<compile_context>
chip_gen: v7x
topology: tpu7x:2x2x1
jax: 0.10.0
libtpu: 0.0.40
codegen_flags: <defaults>
</compile_context>

<pallas_src>
import functools
import math

import jax
import jax.numpy as jnp
from jax.experimental import pallas as pl
from jax.experimental.pallas import tpu as pltpu

LANE = 128   # vreg lane width
SUB = 8      # vreg sublane count (f32)
_LN2 = math.log(2.0)


def _bce_smooth_kernel(logits_ref, target_ref, out_ref, *,
                       smoothing, inner_steps, block_rows, data_rows,
                       has_overhang):
    o = pl.program_id(0)          # parallel slice
    k = pl.program_id(1)          # reduction step within the slice

    @pl.when(k == 0)
    def _init():
        out_ref[...] = jnp.zeros_like(out_ref)

    x = logits_ref[...].astype(jnp.float32)
    t = target_ref[...].astype(jnp.float32)

    # Label smoothing.
    y = t * (1.0 - smoothing) + 0.5 * smoothing

    # Numerically stable BCE-with-logits (matches torch):
    #   loss = max(x, 0) - x*y + log1p(exp(-|x|))
    loss = jnp.maximum(x, 0.0) - x * y + jnp.log1p(jnp.exp(-jnp.abs(x)))

    def _partial_sum(v):
        # (block_rows, 128) -> (8, 128): pure VPU adds across vreg tiles.
        return v.reshape(block_rows // SUB, SUB, LANE).sum(axis=0)

    if not has_overhang:
        # Every block is fully valid: bare accumulate, no masking at all.
        out_ref[...] += _partial_sum(loss)
    else:
        # Only the single overhanging final block (row overhang from the
        # cdiv grid; its out-of-bounds rows contain unspecified data) needs
        # a mask, and it is a cheap row-only compare executed once.
        is_last = jnp.logical_and(o == pl.num_programs(0) - 1,
                                  k == pl.num_programs(1) - 1)

        @pl.when(jnp.logical_not(is_last))
        def _full():
            out_ref[...] += _partial_sum(loss)

        @pl.when(is_last)
        def _masked():
            base = (o * inner_steps + k) * block_rows
            row = jax.lax.broadcasted_iota(jnp.int32, loss.shape, 0)
            keep = (base + row) < data_rows
            out_ref[...] += _partial_sum(jnp.where(keep, loss, 0.0))


def _device_defaults():
    """Generation-dependent (block_rows, num_parallel) defaults."""
    try:
        kind = jax.devices()[0].device_kind.lower()
    except Exception:
        kind = ""
    if "v7" in kind or "tpu7" in kind or "7x" in kind:
        return 4096, 2          # 2 TensorCores per chip -> 2-wide parallel axis
    if "v6" in kind:
        return 4096, 1
    # v5e and older / unknown: scoped VMEM default is small, stay at 1 MiB tiles.
    return 2048, 1


def bce_with_logits_loss_smoothing(logits, target, smoothing=0.1,
                                   pos_weight=None, block_rows=None,
                                   num_parallel=None, vmem_limit_bytes=None):
    """Mean BCE-with-logits loss with label smoothing (pos_weight=None)."""
    if pos_weight is not None:
        # TODO(synk): pos_weight path not implemented (module default is None).
        raise NotImplementedError("pos_weight is not supported by this kernel")
    assert logits.shape == target.shape
    n = int(logits.size)
    assert n > 0

    def_rows, def_par = _device_defaults()
    if block_rows is None:
        block_rows = def_rows
    if num_parallel is None:
        num_parallel = def_par

    # Sublane granularity: 8 for 32-bit, 16 for bf16, 32 for 8-bit inputs.
    sub_mult = SUB
    for dt in (logits.dtype, target.dtype):
        sub_mult = max(sub_mult, SUB * max(1, 4 // jnp.dtype(dt).itemsize))

    rows_needed = pl.cdiv(n, LANE)
    if n % LANE == 0 and rows_needed >= sub_mult:
        # Fast path: lane-aligned size -> plain reshape, no pad, no HBM copy.
        data_rows = rows_needed
        padded_n = n
        lf = jnp.reshape(logits, (data_rows, LANE))
        tf = jnp.reshape(target, (data_rows, LANE))
    else:
        # Ragged path (rare): minimal zero-pad to whole 128-lane rows.  Each
        # zero-pad element (x=0, t=0) contributes exactly ln(2) to the sum;
        # corrected analytically below instead of masking in-kernel.
        data_rows = max(rows_needed, sub_mult)
        padded_n = data_rows * LANE
        lf = jnp.pad(jnp.ravel(logits), (0, padded_n - n)).reshape(data_rows, LANE)
        tf = jnp.pad(jnp.ravel(target), (0, padded_n - n)).reshape(data_rows, LANE)

    # Block rows: multiple of sub_mult, never larger than the data (rounded
    # down so a block never exceeds the array extent).
    br_cap = (data_rows // sub_mult) * sub_mult
    br = max(sub_mult, (int(block_rows) // sub_mult) * sub_mult)
    br = min(br, br_cap)

    total_blocks = pl.cdiv(data_rows, br)
    has_overhang = (data_rows % br) != 0

    # Use the parallel axis only when slices are balanced and there is enough
    # work per slice (single-TC chips keep P=1 via the device default).
    P = num_parallel if (num_parallel > 1
                         and total_blocks % num_parallel == 0
                         and total_blocks >= 2 * num_parallel) else 1
    inner_steps = total_blocks // P

    # Raise scoped-VMEM limit only when the live footprint estimate needs it
    # (big tiles on v5e's 16 MiB default, or user-requested huge blocks).
    if vmem_limit_bytes is None:
        in_bytes = br * LANE * 2 * (jnp.dtype(logits.dtype).itemsize +
                                    jnp.dtype(target.dtype).itemsize)
        est = in_bytes + 6 * br * LANE * 4 + (1 << 20)
        if est > 14 * (1 << 20):
            vmem_limit_bytes = min(2 * est, 48 * (1 << 20))

    kernel = functools.partial(
        _bce_smooth_kernel,
        smoothing=float(smoothing),
        inner_steps=inner_steps,
        block_rows=br,
        data_rows=data_rows,
        has_overhang=has_overhang,
    )

    in_spec = pl.BlockSpec((br, LANE), lambda o, k: (o * inner_steps + k, 0))
    out_spec = pl.BlockSpec((SUB, LANE), lambda o, k: (o, 0))

    partials = pl.pallas_call(
        kernel,
        out_shape=jax.ShapeDtypeStruct((P * SUB, LANE), jnp.float32),
        grid_spec=pltpu.PrefetchScalarGridSpec(
            num_scalar_prefetch=0,
            grid=(P, inner_steps),
            in_specs=[in_spec, in_spec],
            out_specs=out_spec,
        ),
        compiler_params=pltpu.CompilerParams(
            dimension_semantics=("parallel", "arbitrary"),
            vmem_limit_bytes=vmem_limit_bytes),
    )(lf, tf)

    total = jnp.sum(partials, dtype=jnp.float32)
    if padded_n != n:
        total = total - (padded_n - n) * _LN2   # remove ln2 from zero-pads
    return total / n


def _reference(logits, target, smoothing=0.1):
    x = logits.astype(jnp.float32)
    y = target.astype(jnp.float32) * (1.0 - smoothing) + 0.5 * smoothing
    loss = jnp.maximum(x, 0.0) - x * y + jnp.log1p(jnp.exp(-jnp.abs(x)))
    return jnp.mean(loss)


if __name__ == "__main__":
    key = jax.random.PRNGKey(0)
    k1, k2, k3, k4, k5, k6 = jax.random.split(key, 6)

    # 1) NCHW model-head logits, binary targets (2048 elems, lane-aligned):
    #    exercises the zero-copy fast path, single block, no masking.
    B, C, H, W = 2, 4, 16, 16
    logits = jax.random.normal(k1, (B, C, H, W), dtype=jnp.float32)
    target = (jax.random.uniform(k2, (B, C, H, W)) > 0.5).astype(jnp.float32)
    loss = jax.block_until_ready(
        bce_with_logits_loss_smoothing(logits, target, smoothing=0.1))
    ref = _reference(logits, target, smoothing=0.1)
    assert jnp.allclose(loss, ref, rtol=1e-5, atol=1e-5), (loss, ref)

    # 2) Ragged size (12876 elems): minimal pad + ln2 correction, multi-step
    #    reduction, overhanging masked final block.
    logits2 = jax.random.normal(k3, (3, 4, 37, 29), dtype=jnp.float32)
    target2 = (jax.random.uniform(k4, (3, 4, 37, 29)) > 0.5).astype(jnp.float32)
    loss2 = jax.block_until_ready(
        bce_with_logits_loss_smoothing(logits2, target2, smoothing=0.1,
                                       block_rows=16))
    ref2 = _reference(logits2, target2, smoothing=0.1)
    assert jnp.allclose(loss2, ref2, rtol=1e-5, atol=1e-5), (loss2, ref2)

    # 3) Lane-aligned but non-block-aligned rows: 2-wide parallel grid plus an
    #    overhanging masked final block, all without any padding/copy.
    logits3 = jax.random.normal(k5, (53, 128), dtype=jnp.float32)
    target3 = (jax.random.uniform(k6, (53, 128)) > 0.5).astype(jnp.float32)
    loss3 = jax.block_until_ready(
        bce_with_logits_loss_smoothing(logits3, target3, smoothing=0.1,
                                       block_rows=16, num_parallel=2))
    ref3 = _reference(logits3, target3, smoothing=0.1)
    assert jnp.allclose(loss3, ref3, rtol=1e-5, atol=1e-5), (loss3, ref3)

    print("KERNEL_OK")
</pallas_src>

<mosaic_0001>
module attributes {stable_mosaic.version = 11 : i64} {
  func.func @_bce_smooth_kernel(%arg0: i32, %arg1: i32, %arg2: memref<16x128xf32, #tpu.memory_space<vmem>>, %arg3: memref<16x128xf32, #tpu.memory_space<vmem>>, %arg4: memref<8x128xf32, #tpu.memory_space<vmem>>) attributes {dimension_semantics = [#tpu.dimension_semantics<parallel>, #tpu.dimension_semantics<arbitrary>], iteration_bounds = array<i64: 1, 1>, scalar_prefetch = 0 : i64, scratch_operands = 0 : i64, tpu.core_type = #tpu.core_type<tc>, window_params = [{transform_indices = @transform_0, window_bounds = array<i64: 16, 128>}, {transform_indices = @transform_1, window_bounds = array<i64: 16, 128>}, {transform_indices = @transform_2, window_bounds = array<i64: 8, 128>}]} {
    %c0_i32 = arith.constant 0 : i32
    %0 = arith.cmpi eq, %arg1, %c0_i32 : i32
    %1 = arith.extui %0 : i1 to i32
    %c0_i32_0 = arith.constant 0 : i32
    %2 = arith.cmpi ne, %1, %c0_i32_0 : i32
    scf.if %2 {
      %cst_12 = arith.constant 0.000000e+00 : f32
      %24 = vector.broadcast %cst_12 : f32 to vector<8x128xf32>
      %c0_13 = arith.constant 0 : index
      %c0_14 = arith.constant 0 : index
      %25 = vector.load %arg4[%c0_13, %c0_14] : memref<8x128xf32, #tpu.memory_space<vmem>>, vector<8x128xf32>
      tpu.vector_store %arg4[%c0_13, %c0_14], %24 {strides = array<i32>} : memref<8x128xf32, #tpu.memory_space<vmem>>, vector<8x128xf32>,
    } else {
    }
    %c0 = arith.constant 0 : index
    %c0_1 = arith.constant 0 : index
    %3 = vector.load %arg2[%c0, %c0_1] : memref<16x128xf32, #tpu.memory_space<vmem>>, vector<16x128xf32>
    %c0_2 = arith.constant 0 : index
    %c0_3 = arith.constant 0 : index
    %4 = vector.load %arg3[%c0_2, %c0_3] : memref<16x128xf32, #tpu.memory_space<vmem>>, vector<16x128xf32>
    %cst = arith.constant 0.899999976 : f32
    %5 = vector.broadcast %cst : f32 to vector<16x128xf32>
    %6 = arith.mulf %4, %5 : vector<16x128xf32>
    %cst_4 = arith.constant 5.000000e-02 : f32
    %7 = vector.broadcast %cst_4 : f32 to vector<16x128xf32>
    %8 = arith.addf %6, %7 : vector<16x128xf32>
    %cst_5 = arith.constant 0.000000e+00 : f32
    %9 = vector.broadcast %cst_5 : f32 to vector<16x128xf32>
    %10 = arith.maximumf %3, %9 : vector<16x128xf32>
    %11 = arith.mulf %3, %8 : vector<16x128xf32>
    %12 = arith.subf %10, %11 : vector<16x128xf32>
    %13 = math.absf %3 : vector<16x128xf32>
    %cst_6 = arith.constant 0.000000e+00 : f32
    %14 = vector.broadcast %cst_6 : f32 to vector<16x128xf32>
    %15 = arith.subf %14, %13 : vector<16x128xf32>
    %16 = math.exp %15 : vector<16x128xf32>
    %17 = math.log1p %16 : vector<16x128xf32>
    %18 = arith.addf %12, %17 : vector<16x128xf32>
    %c0_7 = arith.constant 0 : index
    %c0_8 = arith.constant 0 : index
    %19 = vector.load %arg4[%c0_7, %c0_8] : memref<8x128xf32, #tpu.memory_space<vmem>>, vector<8x128xf32>
    %20 = vector.shape_cast %18 : vector<16x128xf32> to vector<2x8x128xf32>
    %cst_9 = arith.constant dense<0.000000e+00> : vector<8x128xf32>
    %21 = vector.multi_reduction <add>, %20, %cst_9 [0] : vector<2x8x128xf32> to vector<8x128xf32>
    %22 = arith.addf %19, %21 : vector<8x128xf32>
    %c0_10 = arith.constant 0 : index
    %c0_11 = arith.constant 0 : index
    %23 = vector.load %arg4[%c0_10, %c0_11] : memref<8x128xf32, #tpu.memory_space<vmem>>, vector<8x128xf32>
    tpu.vector_store %arg4[%c0_10, %c0_11], %22 {strides = array<i32>} : memref<8x128xf32, #tpu.memory_space<vmem>>, vector<8x128xf32>,
    return
  }
  func.func @transform_0(%arg0: i32, %arg1: i32) -> (i32, i32) {
    %c1_i32 = arith.constant 1 : i32
    %0 = arith.muli %arg0, %c1_i32 : i32
    %1 = arith.addi %0, %arg1 : i32
    %c0_i32 = arith.constant 0 : i32
    %c0_i32_0 = arith.constant 0 : i32
    return %1, %c0_i32 : i32, i32
  }
  func.func @transform_1(%arg0: i32, %arg1: i32) -> (i32, i32) {
    %c1_i32 = arith.constant 1 : i32
    %0 = arith.muli %arg0, %c1_i32 : i32
    %1 = arith.addi %0, %arg1 : i32
    %c0_i32 = arith.constant 0 : i32
    %c0_i32_0 = arith.constant 0 : i32
    return %1, %c0_i32 : i32, i32
  }
  func.func @transform_2(%arg0: i32, %arg1: i32) -> (i32, i32) {
    %c0_i32 = arith.constant 0 : i32
    %c0_i32_0 = arith.constant 0 : i32
    return %arg0, %c0_i32 : i32, i32
  }
}

</mosaic_0001>

<llo_original>
// kernel: tpu_custom_call.1
$region0: #{tpu_custom_call.1}
  #allocation0 [shape = 'u32[]', space=smem, size = 0x4, offset = 0x4, fixed_abs, tag = 'smem constant byte address 0x4 - core index']
  #allocation1 [shape = 'u32[144,128]{1,0:T(1,128)}', space=vmem, size = 0x12000, scoped, tag = 'internal scratch']
  %s0 = inlined_call_operand.hbm [shape: f32[16,128], index: 0, kind: input, shape index: {}]
  %s1 = inlined_call_operand.hbm [shape: f32[16,128], index: 1, kind: input, shape index: {}]
  %s2 = inlined_call_operand.hbm [shape: f32[8,128], index: 2, kind: output, shape index: {}]
  %s3 = sld [smem:[#allocation0]]
  $region30: #{tpu_custom_call.1} parent=0
    _
  %s5 = ssub.s32 1, %s3
  %s6 = scalar_select 0, %s5, %s3
  $region1: #{tpu_custom_call.1} parent=0
    #allocation2 [shape = 'u8[8192]{0}', space=vmem, size = 0x2000, scoped, tag = 'input window, operand 0, single buffered']
    #allocation3 [shape = 's32[1]{0}', space=sflag, size = 0x4, scoped, tag = 'scoped memory for tpu_custom_call.1']
    #allocation4 [shape = 's32[1]{0}', space=sflag, size = 0x4, scoped, tag = 'scoped memory for tpu_custom_call.1']
    #allocation5 [shape = 'u8[8192]{0}', space=vmem, size = 0x2000, scoped, tag = 'input window, operand 1, single buffered']
    #allocation6 [shape = 's32[1]{0}', space=sflag, size = 0x4, scoped, tag = 'scoped memory for tpu_custom_call.1']
    #allocation7 [shape = 'u8[4096]{0}', space=vmem, size = 0x1000, scoped, tag = 'output window, operand 0, single buffered']
    %7 = vsyncpa [#allocation3], 0
    %8 = vsyncpa [#allocation6], 0
    %9 = vsyncpa [#allocation4], 0
    // Predicated region
    $region2: #{tpu_custom_call.1} parent=1 // pred_check
      _
    $region3: #{tpu_custom_call.1} parent=1 // pred_check_branch
      %11 = sbr.rel (0) target = $region5
    $region4: #{tpu_custom_call.1} parent=1 // pred_region
      %s12 = sadd.s32 0, 0
      %s13 = smul.u32 2, %s12
      %s15 = ssub.s32 256, 256
      %16 = vsyncadd [#allocation3], %s15
      %s17 = smul.addr %s13, 128
      %s18 = scalar_lea.hbm %s0, %s17
      %s19 = sshll.u32 [#allocation2], 4
      %s20 = int_to_ptr.vmem [resolvable:$true] %s19
      %25 = dma.hbm_to_vmem [thread:$0]  %s18, 256, %s20, [#allocation3], 128, 128, 8
    $region5: #{tpu_custom_call.1} parent=1 // pred_fallthru
      _
    // Predicated region
    $region6: #{tpu_custom_call.1} parent=1 // pred_check
      _
    $region7: #{tpu_custom_call.1} parent=1 // pred_check_branch
      %27 = sbr.rel (0) target = $region9
    $region8: #{tpu_custom_call.1} parent=1 // pred_region
      %s28 = sadd.s32 0, 0
      %s29 = smul.u32 2, %s28
      %s31 = ssub.s32 256, 256
      %32 = vsyncadd [#allocation6], %s31
      %s33 = smul.addr %s29, 128
      %s34 = scalar_lea.hbm %s1, %s33
      %s35 = sshll.u32 [#allocation5], 4
      %s36 = int_to_ptr.vmem [resolvable:$true] %s35
      %41 = dma.hbm_to_vmem [thread:$0]  %s34, 256, %s36, [#allocation6], 128, 128, 8
    $region9: #{tpu_custom_call.1} parent=1 // pred_fallthru
      _
    // Predicated region
    $region10: #{tpu_custom_call.1} parent=1 // pred_check
      _
    $region11: #{tpu_custom_call.1} parent=1 // pred_check_branch
      %43 = sbr.rel (0) target = $region13
    $region12: #{tpu_custom_call.1} parent=1 // pred_region
      %44 = dma.done [#allocation3], 256
    $region13: #{tpu_custom_call.1} parent=1 // pred_fallthru
      _
    // Predicated region
    $region14: #{tpu_custom_call.1} parent=1 // pred_check
      _
    $region15: #{tpu_custom_call.1} parent=1 // pred_check_branch
      %46 = sbr.rel (0) target = $region17
    $region16: #{tpu_custom_call.1} parent=1 // pred_region
      %47 = dma.done [#allocation6], 256
    $region17: #{tpu_custom_call.1} parent=1 // pred_fallthru
      _
    %s48 = sadd.s32 0, 0
    %s49 = smul.u32 2, %s48
    %s50 = sadd.s32 0, 0
    %s51 = smul.u32 2, %s50
    %p52 = scmp.eq.s32.totalorder 0, 0
    // Predicated region
    $region18: #{tpu_custom_call.1} parent=1 // pred_check
      %p53 = pneg %p52
    $region19: #{tpu_custom_call.1} parent=1 // pred_check_branch
      %55 = sbr.rel (%p53) target = $region21
    $region20: #{tpu_custom_call.1} parent=1 // pred_region
      %56 = vst [vmem:[#allocation7] sm:$0xff] 0.0
    $region21: #{tpu_custom_call.1} parent=1 // pred_fallthru
      _
    %v57 = vld [vmem:[#allocation2] sm:$0xff]
    %v58 = vld [vmem:[#allocation2 + $0x8] sm:$0xff]
    %v59 = vld [vmem:[#allocation5] sm:$0xff]
    %v60 = vld [vmem:[#allocation5 + $0x8] sm:$0xff]
    %v61 = vmul.f32 %v59, 0.9
    %v62 = vmul.f32 %v60, 0.9
    %v63 = vadd.f32 %v61, 0.05
    %v64 = vadd.f32 %v62, 0.05
    %v65 = vmax.f32 %v57, 0.0
    %v66 = vmax.f32 %v58, 0.0
    %v67 = vmul.f32 %v57, %v63
    %v68 = vmul.f32 %v58, %v64
    %v69 = vsub.f32 %v65, %v67
    %v70 = vsub.f32 %v66, %v68
    %v71 = vand.u32 2147483647, %v57
    %v72 = vand.u32 2147483647, %v58
    %v73 = vsub.f32 0.0, %v71
    %v74 = vsub.f32 0.0, %v72
    %v75 = vmul.f32 %v73, 1.442695
    %v76 = vpow.pop %v75
    %v77 = vmul.f32 %v74, 1.442695
    %v78 = vpow.pop %v77
    %v79 = vadd.f32 %v76, 1.0
    %v80 = vlog2.pop %v79
    %v81 = vmul.f32 %v80, 0.6931472
    %v82 = vmul.f32 -0.5, %v76
    %v83 = vadd.f32 %v82, 1.0
    %v84 = vmul.f32 %v83, %v76
    %v85 = vand.u32 2147483647, %v76
    %vm86 = vcmp.lt.f32.partialorder %v85, 0.0004427343
    %v87 = vsel %vm86, %v84, %v81
    %v88 = vadd.f32 %v78, 1.0
    %v89 = vlog2.pop %v88
    %v90 = vmul.f32 %v89, 0.6931472
    %v91 = vmul.f32 -0.5, %v78
    %v92 = vadd.f32 %v91, 1.0
    %v93 = vmul.f32 %v92, %v78
    %v94 = vand.u32 2147483647, %v78
    %vm95 = vcmp.lt.f32.partialorder %v94, 0.0004427343
    %v96 = vsel %vm95, %v93, %v90
    %v97 = vadd.f32 %v69, %v87
    %v98 = vadd.f32 %v70, %v96
    %v99 = vld [vmem:[#allocation7] sm:$0xff]
    %v100 = vadd.f32 %v97, %v98
    %v101 = vadd.f32 %v99, %v100
    %102 = vst [vmem:[#allocation7] sm:$0xff] %v101
    // Predicated region
    $region22: #{tpu_custom_call.1} parent=1 // pred_check
      _
    $region23: #{tpu_custom_call.1} parent=1 // pred_check_branch
      %104 = sbr.rel (0) target = $region25
    $region24: #{tpu_custom_call.1} parent=1 // pred_region
      %s106 = ssub.s32 128, 128
      %107 = vsyncadd [#allocation4], %s106
      %s109 = sshll.u32 [#allocation7], 4
      %s110 = int_to_ptr.vmem [resolvable:$true] %s109
      %112 = dma.vmem_to_hbm [thread:$0]  %s110, 128, %s2, [#allocation4]
    $region25: #{tpu_custom_call.1} parent=1 // pred_fallthru
      _
    // Predicated region
    $region26: #{tpu_custom_call.1} parent=1 // pred_check
      _
    $region27: #{tpu_custom_call.1} parent=1 // pred_check_branch
      %114 = sbr.rel (0) target = $region29
    $region28: #{tpu_custom_call.1} parent=1 // pred_region
      %115 = dma.done [#allocation4], 128
    $region29: #{tpu_custom_call.1} parent=1 // pred_fallthru
      _
    %116 = vsyncpa [#allocation3], 1
    %117 = vsyncpa [#allocation6], 1
    %118 = vsyncpa [#allocation4], 1

</llo_original>
